<compile_context>
chip_gen: v6e
topology: v6e:2x2x1
jax: 0.10.0
libtpu: 0.0.40
codegen_flags: <defaults>
</compile_context>

<pallas_src>
import functools

import jax
import jax.numpy as jnp
from jax.experimental import pallas as pl
from jax.experimental.pallas import tpu as pltpu


def _round_up(x, m):
    return ((x + m - 1) // m) * m


def _mlp_prefix_kernel(x_ref, w1_ref, b1_ref, w2_ref, b2_ref, w3_ref, b3_ref,
                       o_ref, h2_ref):
    """grid = (batch tiles i, output-N tiles j).

    At j == 0 compute h2 = relu(relu(x@w1+b1)@w2+b2) for this batch tile and
    cache it (bf16) in VMEM scratch; every j step does h2 @ w3_tile + b3_tile.
    """
    j = pl.program_id(1)

    @pl.when(j == 0)
    def _():
        x = x_ref[...]                                    # bf16 (tm, d0_p)
        h1 = jnp.dot(x, w1_ref[...], preferred_element_type=jnp.float32)
        h1 = jnp.maximum(h1 + b1_ref[...], 0.0)           # f32 bias + ReLU
        h2 = jnp.dot(h1.astype(w2_ref.dtype), w2_ref[...],
                     preferred_element_type=jnp.float32)
        h2 = jnp.maximum(h2 + b2_ref[...], 0.0)
        h2_ref[...] = h2.astype(h2_ref.dtype)             # cache as bf16

    h3 = jnp.dot(h2_ref[...], w3_ref[...],
                 preferred_element_type=jnp.float32)
    o_ref[...] = (h3 + b3_ref[...]).astype(o_ref.dtype)


@functools.partial(jax.jit, static_argnames=("k_prefix", "gpt_embed_size"))
def mlp_prefix_mapper(z, params, *, k_prefix, gpt_embed_size):
    """z: (B, input_size) -> (B, k_prefix, gpt_embed_size)."""
    w1, b1, w2, b2, w3, b3 = params
    B, d0 = z.shape
    d1 = w1.shape[1]
    d2 = w2.shape[1]
    out_dim = k_prefix * gpt_embed_size

    # Lane-aligned (multiple-of-128) feature dims.
    d0_p = _round_up(d0, 128)
    d1_p = _round_up(d1, 128)
    d2_p = _round_up(d2, 128)

    # Batch tile: multiple of 8; cap at 256 so f32/bf16 intermediates stay
    # well inside scoped VMEM on every generation.
    tm = 256 if B >= 256 else _round_up(B, 8)
    B_p = _round_up(B, tm)

    # N tile for the third layer (and output): multiple of 128, <= 512.
    tn = min(512, _round_up(out_dim, 128))
    out_dim_p = _round_up(out_dim, tn)

    cdt = jnp.bfloat16  # MXU compute dtype

    def pad2(a, rows, cols, dtype):
        a = a.astype(dtype)
        return jnp.pad(a, ((0, rows - a.shape[0]), (0, cols - a.shape[1])))

    z_p = pad2(z, B_p, d0_p, cdt)
    w1_p = pad2(w1, d0_p, d1_p, cdt)
    w2_p = pad2(w2, d1_p, d2_p, cdt)
    w3_p = pad2(w3, d2_p, out_dim_p, cdt)
    b1_p = pad2(b1, 1, d1_p, jnp.float32)
    b2_p = pad2(b2, 1, d2_p, jnp.float32)
    b3_p = pad2(b3, 1, out_dim_p, jnp.float32)

    grid = (B_p // tm, out_dim_p // tn)

    flops = 2 * B_p * (d0_p * d1_p + d1_p * d2_p + d2_p * out_dim_p)
    bytes_accessed = (
        z_p.size * 2 + w1_p.size * 2 + w2_p.size * 2 + w3_p.size * 2
        + (b1_p.size + b2_p.size + b3_p.size) * 4
        + B_p * out_dim_p * 4)

    out_flat = pl.pallas_call(
        _mlp_prefix_kernel,
        out_shape=jax.ShapeDtypeStruct((B_p, out_dim_p), z.dtype),
        grid_spec=pltpu.PrefetchScalarGridSpec(
            num_scalar_prefetch=0,
            grid=grid,
            in_specs=[
                pl.BlockSpec((tm, d0_p), lambda i, j: (i, 0)),     # x tile
                pl.BlockSpec((d0_p, d1_p), lambda i, j: (0, 0)),   # w1 resident
                pl.BlockSpec((1, d1_p), lambda i, j: (0, 0)),      # b1 resident
                pl.BlockSpec((d1_p, d2_p), lambda i, j: (0, 0)),   # w2 resident
                pl.BlockSpec((1, d2_p), lambda i, j: (0, 0)),      # b2 resident
                pl.BlockSpec((d2_p, tn), lambda i, j: (0, j)),     # w3 N-tiled
                pl.BlockSpec((1, tn), lambda i, j: (0, j)),        # b3 N-tiled
            ],
            out_specs=pl.BlockSpec((tm, tn), lambda i, j: (i, j)),
            scratch_shapes=[pltpu.VMEM((tm, d2_p), cdt)],          # cached h2
        ),
        compiler_params=pltpu.CompilerParams(
            dimension_semantics=("parallel", "arbitrary"),
            vmem_limit_bytes=64 * 1024 * 1024),
        cost_estimate=pl.CostEstimate(
            flops=flops, transcendentals=0, bytes_accessed=bytes_accessed),
    )(z_p, w1_p, b1_p, w2_p, b2_p, w3_p, b3_p)

    out = out_flat[:B, :out_dim]
    return out.reshape(-1, k_prefix, gpt_embed_size)


def init_params(key, input_size, gpt_embed_size, k_prefix, dtype=jnp.float32):
    """Deterministic synthetic init matching nn.Linear shapes (stored transposed)."""
    d0 = input_size
    d1 = input_size * 2
    d2 = k_prefix * gpt_embed_size // 2
    d3 = k_prefix * gpt_embed_size

    keys = jax.random.split(key, 6)

    def lin(kw, kb, fan_in, fan_out):
        bound = 1.0 / jnp.sqrt(fan_in)
        w = jax.random.uniform(kw, (fan_in, fan_out), dtype, -bound, bound)
        b = jax.random.uniform(kb, (1, fan_out), dtype, -bound, bound)
        return w, b

    w1, b1 = lin(keys[0], keys[1], d0, d1)
    w2, b2 = lin(keys[2], keys[3], d1, d2)
    w3, b3 = lin(keys[4], keys[5], d2, d3)
    return (w1, b1, w2, b2, w3, b3)


def reference_forward(z, params, k_prefix, gpt_embed_size):
    w1, b1, w2, b2, w3, b3 = params
    h = jnp.maximum(z @ w1 + b1, 0.0)
    h = jnp.maximum(h @ w2 + b2, 0.0)
    h = h @ w3 + b3
    return h.reshape(-1, k_prefix, gpt_embed_size)


if __name__ == "__main__":
    # Small shapes consistent with MLPPrefixMapper(input_size=32, gpt_embed_size=32, k_prefix=8)
    batch = 2
    input_size = 32
    gpt_embed_size = 32
    k_prefix = 8

    key = jax.random.PRNGKey(0)
    k_z, k_p = jax.random.split(key)

    z = jax.random.normal(k_z, (batch, input_size), jnp.float32)
    params = init_params(k_p, input_size, gpt_embed_size, k_prefix)

    out = mlp_prefix_mapper(z, params, k_prefix=k_prefix,
                            gpt_embed_size=gpt_embed_size)
    out = jax.block_until_ready(out)

    ref = reference_forward(z, params, k_prefix, gpt_embed_size)
    assert out.shape == (batch, k_prefix, gpt_embed_size), out.shape
    # bf16 matmuls with f32 accumulation: loosen tolerance vs the f32 reference.
    assert jnp.allclose(out, ref, atol=5e-2, rtol=5e-2), "mismatch vs reference"

    print("KERNEL_OK")
</pallas_src>

<mosaic_0001>
module attributes {stable_mosaic.version = 11 : i64} {
  func.func @_mlp_prefix_kernel(%arg0: i32, %arg1: i32, %arg2: memref<8x128xbf16, #tpu.memory_space<vmem>>, %arg3: memref<128x128xbf16, #tpu.memory_space<vmem>>, %arg4: memref<1x128xf32, #tpu.memory_space<vmem>>, %arg5: memref<128x128xbf16, #tpu.memory_space<vmem>>, %arg6: memref<1x128xf32, #tpu.memory_space<vmem>>, %arg7: memref<128x256xbf16, #tpu.memory_space<vmem>>, %arg8: memref<1x256xf32, #tpu.memory_space<vmem>>, %arg9: memref<8x256xf32, #tpu.memory_space<vmem>>, %arg10: memref<8x128xbf16, #tpu.memory_space<vmem>>) attributes {dimension_semantics = [#tpu.dimension_semantics<parallel>, #tpu.dimension_semantics<arbitrary>], iteration_bounds = array<i64: 1, 1>, scalar_prefetch = 0 : i64, scratch_operands = 1 : i64, tpu.core_type = #tpu.core_type<tc>, window_params = [{transform_indices = @transform_0, window_bounds = array<i64: 8, 128>}, {pipeline_mode = #tpu.pipeline_mode<synchronous>, transform_indices = @transform_1, window_bounds = array<i64: 128, 128>}, {pipeline_mode = #tpu.pipeline_mode<synchronous>, transform_indices = @transform_2, window_bounds = array<i64: 1, 128>}, {pipeline_mode = #tpu.pipeline_mode<synchronous>, transform_indices = @transform_3, window_bounds = array<i64: 128, 128>}, {pipeline_mode = #tpu.pipeline_mode<synchronous>, transform_indices = @transform_4, window_bounds = array<i64: 1, 128>}, {transform_indices = @transform_5, window_bounds = array<i64: 128, 256>}, {transform_indices = @transform_6, window_bounds = array<i64: 1, 256>}, {transform_indices = @transform_7, window_bounds = array<i64: 8, 256>}]} {
    %c0_i32 = arith.constant 0 : i32
    %0 = arith.cmpi eq, %arg1, %c0_i32 : i32
    %1 = arith.extui %0 : i1 to i32
    %c0_i32_0 = arith.constant 0 : i32
    %2 = arith.cmpi ne, %1, %c0_i32_0 : i32
    scf.if %2 {
      %c0_8 = arith.constant 0 : index
      %c0_9 = arith.constant 0 : index
      %10 = vector.load %arg2[%c0_8, %c0_9] : memref<8x128xbf16, #tpu.memory_space<vmem>>, vector<8x128xbf16>
      %c0_10 = arith.constant 0 : index
      %c0_11 = arith.constant 0 : index
      %11 = vector.load %arg3[%c0_10, %c0_11] : memref<128x128xbf16, #tpu.memory_space<vmem>>, vector<128x128xbf16>
      %cst_12 = arith.constant dense<0.000000e+00> : vector<8x128xf32>
      %12 = tpu.matmul %10, %11, %cst_12 {dimension_numbers = #tpu.dot_dimension_numbers<[1], [0], [0], [1], [0, 0, 1, 1], [], []>} : vector<8x128xbf16>, vector<128x128xbf16>, vector<8x128xf32> -> vector<8x128xf32>
      %c0_13 = arith.constant 0 : index
      %c0_14 = arith.constant 0 : index
      %13 = vector.load %arg4[%c0_13, %c0_14] : memref<1x128xf32, #tpu.memory_space<vmem>>, vector<1x128xf32>
      %14 = vector.broadcast %13 : vector<1x128xf32> to vector<8x128xf32>
      %15 = arith.addf %12, %14 : vector<8x128xf32>
      %cst_15 = arith.constant 0.000000e+00 : f32
      %16 = vector.broadcast %cst_15 : f32 to vector<8x128xf32>
      %17 = arith.maximumf %15, %16 : vector<8x128xf32>
      %18 = arith.truncf %17 : vector<8x128xf32> to vector<8x128xbf16>
      %c0_16 = arith.constant 0 : index
      %c0_17 = arith.constant 0 : index
      %19 = vector.load %arg5[%c0_16, %c0_17] : memref<128x128xbf16, #tpu.memory_space<vmem>>, vector<128x128xbf16>
      %cst_18 = arith.constant dense<0.000000e+00> : vector<8x128xf32>
      %20 = tpu.matmul %18, %19, %cst_18 {dimension_numbers = #tpu.dot_dimension_numbers<[1], [0], [0], [1], [0, 0, 1, 1], [], []>} : vector<8x128xbf16>, vector<128x128xbf16>, vector<8x128xf32> -> vector<8x128xf32>
      %c0_19 = arith.constant 0 : index
      %c0_20 = arith.constant 0 : index
      %21 = vector.load %arg6[%c0_19, %c0_20] : memref<1x128xf32, #tpu.memory_space<vmem>>, vector<1x128xf32>
      %22 = vector.broadcast %21 : vector<1x128xf32> to vector<8x128xf32>
      %23 = arith.addf %20, %22 : vector<8x128xf32>
      %cst_21 = arith.constant 0.000000e+00 : f32
      %24 = vector.broadcast %cst_21 : f32 to vector<8x128xf32>
      %25 = arith.maximumf %23, %24 : vector<8x128xf32>
      %26 = arith.truncf %25 : vector<8x128xf32> to vector<8x128xbf16>
      %c0_22 = arith.constant 0 : index
      %c0_23 = arith.constant 0 : index
      %27 = vector.load %arg10[%c0_22, %c0_23] : memref<8x128xbf16, #tpu.memory_space<vmem>>, vector<8x128xbf16>
      tpu.vector_store %arg10[%c0_22, %c0_23], %26 {strides = array<i32>} : memref<8x128xbf16, #tpu.memory_space<vmem>>, vector<8x128xbf16>,
    } else {
    }
    %c0 = arith.constant 0 : index
    %c0_1 = arith.constant 0 : index
    %3 = vector.load %arg10[%c0, %c0_1] : memref<8x128xbf16, #tpu.memory_space<vmem>>, vector<8x128xbf16>
    %c0_2 = arith.constant 0 : index
    %c0_3 = arith.constant 0 : index
    %4 = vector.load %arg7[%c0_2, %c0_3] : memref<128x256xbf16, #tpu.memory_space<vmem>>, vector<128x256xbf16>
    %cst = arith.constant dense<0.000000e+00> : vector<8x256xf32>
    %5 = tpu.matmul %3, %4, %cst {dimension_numbers = #tpu.dot_dimension_numbers<[1], [0], [0], [1], [0, 0, 1, 1], [], []>} : vector<8x128xbf16>, vector<128x256xbf16>, vector<8x256xf32> -> vector<8x256xf32>
    %c0_4 = arith.constant 0 : index
    %c0_5 = arith.constant 0 : index
    %6 = vector.load %arg8[%c0_4, %c0_5] : memref<1x256xf32, #tpu.memory_space<vmem>>, vector<1x256xf32>
    %7 = vector.broadcast %6 : vector<1x256xf32> to vector<8x256xf32>
    %8 = arith.addf %5, %7 : vector<8x256xf32>
    %c0_6 = arith.constant 0 : index
    %c0_7 = arith.constant 0 : index
    %9 = vector.load %arg9[%c0_6, %c0_7] : memref<8x256xf32, #tpu.memory_space<vmem>>, vector<8x256xf32>
    tpu.vector_store %arg9[%c0_6, %c0_7], %8 {strides = array<i32>} : memref<8x256xf32, #tpu.memory_space<vmem>>, vector<8x256xf32>,
    return
  }
  func.func @transform_0(%arg0: i32, %arg1: i32) -> (i32, i32) {
    %c0_i32 = arith.constant 0 : i32
    %c0_i32_0 = arith.constant 0 : i32
    return %arg0, %c0_i32 : i32, i32
  }
  func.func @transform_1(%arg0: i32, %arg1: i32) -> (i32, i32) {
    %c0_i32 = arith.constant 0 : i32
    %c0_i32_0 = arith.constant 0 : i32
    %c0_i32_1 = arith.constant 0 : i32
    return %c0_i32, %c0_i32_0 : i32, i32
  }
  func.func @transform_2(%arg0: i32, %arg1: i32) -> (i32, i32) {
    %c0_i32 = arith.constant 0 : i32
    %c0_i32_0 = arith.constant 0 : i32
    %c0_i32_1 = arith.constant 0 : i32
    return %c0_i32, %c0_i32_0 : i32, i32
  }
  func.func @transform_3(%arg0: i32, %arg1: i32) -> (i32, i32) {
    %c0_i32 = arith.constant 0 : i32
    %c0_i32_0 = arith.constant 0 : i32
    %c0_i32_1 = arith.constant 0 : i32
    return %c0_i32, %c0_i32_0 : i32, i32
  }
  func.func @transform_4(%arg0: i32, %arg1: i32) -> (i32, i32) {
    %c0_i32 = arith.constant 0 : i32
    %c0_i32_0 = arith.constant 0 : i32
    %c0_i32_1 = arith.constant 0 : i32
    return %c0_i32, %c0_i32_0 : i32, i32
  }
  func.func @transform_5(%arg0: i32, %arg1: i32) -> (i32, i32) {
    %c0_i32 = arith.constant 0 : i32
    %c0_i32_0 = arith.constant 0 : i32
    return %c0_i32, %arg1 : i32, i32
  }
  func.func @transform_6(%arg0: i32, %arg1: i32) -> (i32, i32) {
    %c0_i32 = arith.constant 0 : i32
    %c0_i32_0 = arith.constant 0 : i32
    return %c0_i32, %arg1 : i32, i32
  }
  func.func @transform_7(%arg0: i32, %arg1: i32) -> (i32, i32) {
    %c0_i32 = arith.constant 0 : i32
    return %arg0, %arg1 : i32, i32
  }
}

</mosaic_0001>

<llo_original>
// kernel: mlp_prefix_mapper.1
$region0: #{mlp_prefix_mapper.1}
  #allocation0 [shape = 'u32[]', space=smem, size = 0x4, offset = 0x4, fixed_abs, tag = 'smem constant byte address 0x4 - core index']
  #allocation1 [shape = 'u32[144,128]{1,0:T(1,128)}', space=vmem, size = 0x12000, scoped, tag = 'internal scratch']
  #allocation2 [shape = 'bf16[8,128]{1,0:T(8,128)(2,1)}', space=vmem, size = 0x800, scoped, tag = 'scratch operand']
  %s0 = inlined_call_operand.vmem [shape: bf16[8,128], index: 0, kind: input, shape index: {}]
  %s1 = inlined_call_operand.vmem [shape: bf16[128,128], index: 1, kind: input, shape index: {}]
  %s2 = inlined_call_operand.vmem [shape: f32[1,128], index: 2, kind: input, shape index: {}]
  %s3 = inlined_call_operand.vmem [shape: bf16[128,128], index: 3, kind: input, shape index: {}]
  %s4 = inlined_call_operand.vmem [shape: f32[1,128], index: 4, kind: input, shape index: {}]
  %s5 = inlined_call_operand.vmem [shape: bf16[128,256], index: 5, kind: input, shape index: {}]
  %s6 = inlined_call_operand.vmem [shape: f32[1,256], index: 6, kind: input, shape index: {}]
  %s7 = inlined_call_operand.vmem [shape: f32[8,256], index: 7, kind: output, shape index: {}]
  %s8 = sld [smem:[#allocation0]]
  $region42: #{mlp_prefix_mapper.1} parent=0
    _
  %s10 = ssub.s32 1, %s8
  %s11 = scalar_select 0, %s10, %s8
  // Predicated region
  $region2: #{mlp_prefix_mapper.1} parent=0 // pred_check
    _
  $region3: #{mlp_prefix_mapper.1} parent=0 // pred_check_branch
    %13 = sbr.rel (0) target = $region5
  $region4: #{mlp_prefix_mapper.1} parent=0 // pred_region
    _
  $region5: #{mlp_prefix_mapper.1} parent=0 // pred_fallthru
    _
  // Predicated region
  $region6: #{mlp_prefix_mapper.1} parent=0 // pred_check
    _
  $region7: #{mlp_prefix_mapper.1} parent=0 // pred_check_branch
    %15 = sbr.rel (0) target = $region9
  $region8: #{mlp_prefix_mapper.1} parent=0 // pred_region
    _
  $region9: #{mlp_prefix_mapper.1} parent=0 // pred_fallthru
    _
  // Predicated region
  $region10: #{mlp_prefix_mapper.1} parent=0 // pred_check
    _
  $region11: #{mlp_prefix_mapper.1} parent=0 // pred_check_branch
    %17 = sbr.rel (0) target = $region13
  $region12: #{mlp_prefix_mapper.1} parent=0 // pred_region
    _
  $region13: #{mlp_prefix_mapper.1} parent=0 // pred_fallthru
    _
  // Predicated region
  $region14: #{mlp_prefix_mapper.1} parent=0 // pred_check
    _
  $region15: #{mlp_prefix_mapper.1} parent=0 // pred_check_branch
    %19 = sbr.rel (0) target = $region17
  $region16: #{mlp_prefix_mapper.1} parent=0 // pred_region
    _
  $region17: #{mlp_prefix_mapper.1} parent=0 // pred_fallthru
    _
  // Predicated region
  $region18: #{mlp_prefix_mapper.1} parent=0 // pred_check
    _
  $region19: #{mlp_prefix_mapper.1} parent=0 // pred_check_branch
    %21 = sbr.rel (0) target = $region21
  $region20: #{mlp_prefix_mapper.1} parent=0 // pred_region
    _
  $region21: #{mlp_prefix_mapper.1} parent=0 // pred_fallthru
    _
  // Predicated region
  $region22: #{mlp_prefix_mapper.1} parent=0 // pred_check
    _
  $region23: #{mlp_prefix_mapper.1} parent=0 // pred_check_branch
    %23 = sbr.rel (0) target = $region25
  $region24: #{mlp_prefix_mapper.1} parent=0 // pred_region
    _
  $region25: #{mlp_prefix_mapper.1} parent=0 // pred_fallthru
    _
  // Predicated region
  $region26: #{mlp_prefix_mapper.1} parent=0 // pred_check
    _
  $region27: #{mlp_prefix_mapper.1} parent=0 // pred_check_branch
    %25 = sbr.rel (0) target = $region29
  $region28: #{mlp_prefix_mapper.1} parent=0 // pred_region
    _
  $region29: #{mlp_prefix_mapper.1} parent=0 // pred_fallthru
    _
  %p27 = scmp.eq.s32.totalorder 0, 0
  // Predicated region
  $region30: #{mlp_prefix_mapper.1} parent=0 // pred_check
    %p28 = pneg %p27
  $region31: #{mlp_prefix_mapper.1} parent=0 // pred_check_branch
    %30 = sbr.rel (%p28) target = $region33
  $region32: #{mlp_prefix_mapper.1} parent=0 // pred_region
    %v31 = vld [vmem:[%s0] sm:$0xf]
    %v32 = vld [vmem:[%s1] sm:$0xf]
    %v33 = vld [vmem:[%s1 + $0x4] sm:$0xf]
    %v34 = vld [vmem:[%s1 + $0x8] sm:$0xf]
    %v35 = vld [vmem:[%s1 + $0xc] sm:$0xf]
    %v36 = vld [vmem:[%s1 + $0x10] sm:$0xf]
    %v37 = vld [vmem:[%s1 + $0x14] sm:$0xf]
    %v38 = vld [vmem:[%s1 + $0x18] sm:$0xf]
    %v39 = vld [vmem:[%s1 + $0x1c] sm:$0xf]
    %v40 = vld [vmem:[%s1 + $0x20] sm:$0xf]
    %v41 = vld [vmem:[%s1 + $0x24] sm:$0xf]
    %v42 = vld [vmem:[%s1 + $0x28] sm:$0xf]
    %v43 = vld [vmem:[%s1 + $0x2c] sm:$0xf]
    %v44 = vld [vmem:[%s1 + $0x30] sm:$0xf]
    %v45 = vld [vmem:[%s1 + $0x34] sm:$0xf]
    %v46 = vld [vmem:[%s1 + $0x38] sm:$0xf]
    %v47 = vld [vmem:[%s1 + $0x3c] sm:$0xf]
    %v48 = vld [vmem:[%s2] sm:$0x1]
    %v50 = vlaneseq
    %v51 = vshrl.u32 %v50, 7
    %v52 = vsub.s32 0, %v51
    %v53 = vrot.slane %v48, %v52
    %v71 = vunpack.c.l.b16 %v32
    %v72 = vunpack.c.l.b16 %v33
    %v73 = vunpack.c.l.b16 %v34
    %v74 = vunpack.c.l.b16 %v35
    %v75 = vunpack.c.l.b16 %v36
    %v76 = vunpack.c.l.b16 %v37
    %v77 = vunpack.c.l.b16 %v38
    %v78 = vunpack.c.l.b16 %v39
    %v79 = vunpack.c.l.b16 %v40
    %v80 = vunpack.c.l.b16 %v41
    %v81 = vunpack.c.l.b16 %v42
    %v82 = vunpack.c.l.b16 %v43
    %v83 = vunpack.c.l.b16 %v44
    %v84 = vunpack.c.l.b16 %v45
    %v85 = vunpack.c.l.b16 %v46
    %v86 = vunpack.c.l.b16 %v47
    %v87 = vpack.c.b16 %v72, %v71
    %v88 = vpack.c.b16 %v74, %v73
    %v89 = vpack.c.b16 %v76, %v75
    %v90 = vpack.c.b16 %v78, %v77
    %v91 = vpack.c.b16 %v80, %v79
    %v92 = vpack.c.b16 %v82, %v81
    %v93 = vpack.c.b16 %v84, %v83
    %v94 = vpack.c.b16 %v86, %v85
    %103 = vmatprep.subr.bf16.mxu0 0
    %104 = vmatpush1.bf16.msra.mxu0 %v94
    %105 = vmatprep.subr.bf16.mxu0 0
    %106 = vmatpush1.bf16.msra.mxu0 %v93
    %107 = vmatprep.subr.bf16.mxu0 0
    %108 = vmatpush1.bf16.msra.mxu0 %v92
    %109 = vmatprep.subr.bf16.mxu0 0
    %110 = vmatpush1.bf16.msra.mxu0 %v91
    %111 = vmatprep.subr.bf16.mxu0 0
    %112 = vmatpush1.bf16.msra.mxu0 %v90
    %113 = vmatprep.subr.bf16.mxu0 0
    %114 = vmatpush1.bf16.msra.mxu0 %v89
    %115 = vmatprep.subr.bf16.mxu0 0
    %116 = vmatpush1.bf16.msra.mxu0 %v88
    %117 = vmatprep.subr.bf16.mxu0 0
    %118 = vmatpush1.bf16.msra.mxu0 %v87
    %119 = vmatprep.subr.bf16.mxu0 0
    %120 = vmatpush2.bf16.msra.mxu0 0
    %121 = vmatprep.subr.bf16.mxu0 0
    %122 = vmatpush2.bf16.msra.mxu0 0
    %123 = vmatprep.subr.bf16.mxu0 0
    %124 = vmatpush2.bf16.msra.mxu0 0
    %125 = vmatprep.subr.bf16.mxu0 0
    %126 = vmatpush2.bf16.msra.mxu0 0
    %127 = vmatprep.subr.bf16.mxu0 0
    %128 = vmatpush2.bf16.msra.mxu0 0
    %129 = vmatprep.subr.bf16.mxu0 0
    %130 = vmatpush2.bf16.msra.mxu0 0
    %131 = vmatprep.subr.bf16.mxu0 0
    %132 = vmatpush2.bf16.msra.mxu0 0
    %133 = vmatprep.subr.bf16.mxu0 0
    %134 = vmatpush2.bf16.msra.mxu0 0
    %135 = vmatprep.mubr.bf16.mxu0 0
    %136 = vmatmul.mubr.bf16.gmra.mxu0 %v31
    %v137 = vpop.f32.mrf.mxu0
    %v138 = vadd.f32 %v53, %v137
    %v139 = vpop.f32.mrf.mxu0
    %v140 = vpop.f32.mrf.mxu0
    %v141 = vpop.f32.mrf.mxu0
    %142 = vdwg.mxu0
    %v143 = vmax.f32 %v138, 0.0
    %v144 = vpack.c.bf16 %v143, %v143
    %v145 = vld [vmem:[%s3] sm:$0xf]
    %v146 = vld [vmem:[%s3 + $0x4] sm:$0xf]
    %v147 = vld [vmem:[%s3 + $0x8] sm:$0xf]
    %v148 = vld [vmem:[%s3 + $0xc] sm:$0xf]
    %v149 = vld [vmem:[%s3 + $0x10] sm:$0xf]
    %v150 = vld [vmem:[%s3 + $0x14] sm:$0xf]
    %v151 = vld [vmem:[%s3 + $0x18] sm:$0xf]
    %v152 = vld [vmem:[%s3 + $0x1c] sm:$0xf]
    %v153 = vld [vmem:[%s3 + $0x20] sm:$0xf]
    %v154 = vld [vmem:[%s3 + $0x24] sm:$0xf]
    %v155 = vld [vmem:[%s3 + $0x28] sm:$0xf]
    %v156 = vld [vmem:[%s3 + $0x2c] sm:$0xf]
    %v157 = vld [vmem:[%s3 + $0x30] sm:$0xf]
    %v158 = vld [vmem:[%s3 + $0x34] sm:$0xf]
    %v159 = vld [vmem:[%s3 + $0x38] sm:$0xf]
    %v160 = vld [vmem:[%s3 + $0x3c] sm:$0xf]
    %v161 = vld [vmem:[%s4] sm:$0x1]
    %v163 = vlaneseq
    %v164 = vshrl.u32 %v163, 7
    %v165 = vsub.s32 0, %v164
    %v166 = vrot.slane %v161, %v165
    %v184 = vunpack.c.l.b16 %v145
    %v185 = vunpack.c.l.b16 %v146
    %v186 = vunpack.c.l.b16 %v147
    %v187 = vunpack.c.l.b16 %v148
    %v188 = vunpack.c.l.b16 %v149
    %v189 = vunpack.c.l.b16 %v150
    %v190 = vunpack.c.l.b16 %v151
    %v191 = vunpack.c.l.b16 %v152
    %v192 = vunpack.c.l.b16 %v153
    %v193 = vunpack.c.l.b16 %v154
    %v194 = vunpack.c.l.b16 %v155
    %v195 = vunpack.c.l.b16 %v156
    %v196 = vunpack.c.l.b16 %v157
    %v197 = vunpack.c.l.b16 %v158
    %v198 = vunpack.c.l.b16 %v159
    %v199 = vunpack.c.l.b16 %v160
    %v200 = vpack.c.b16 %v185, %v184
    %v201 = vpack.c.b16 %v187, %v186
    %v202 = vpack.c.b16 %v189, %v188
    %v203 = vpack.c.b16 %v191, %v190
    %v204 = vpack.c.b16 %v193, %v192
    %v205 = vpack.c.b16 %v195, %v194
    %v206 = vpack.c.b16 %v197, %v196
    %v207 = vpack.c.b16 %v199, %v198
    %216 = vmatprep.subr.bf16.mxu0 0
    %217 = vmatpush1.bf16.msra.mxu0 %v207
    %218 = vmatprep.subr.bf16.mxu0 0
    %219 = vmatpush1.bf16.msra.mxu0 %v206
    %220 = vmatprep.subr.bf16.mxu0 0
    %221 = vmatpush1.bf16.msra.mxu0 %v205
    %222 = vmatprep.subr.bf16.mxu0 0
    %223 = vmatpush1.bf16.msra.mxu0 %v204
    %224 = vmatprep.subr.bf16.mxu0 0
    %225 = vmatpush1.bf16.msra.mxu0 %v203
    %226 = vmatprep.subr.bf16.mxu0 0
    %227 = vmatpush1.bf16.msra.mxu0 %v202
    %228 = vmatprep.subr.bf16.mxu0 0
    %229 = vmatpush1.bf16.msra.mxu0 %v201
    %230 = vmatprep.subr.bf16.mxu0 0
    %231 = vmatpush1.bf16.msra.mxu0 %v200
    %232 = vmatprep.subr.bf16.mxu0 0
    %233 = vmatpush2.bf16.msra.mxu0 0
    %234 = vmatprep.subr.bf16.mxu0 0
    %235 = vmatpush2.bf16.msra.mxu0 0
    %236 = vmatprep.subr.bf16.mxu0 0
    %237 = vmatpush2.bf16.msra.mxu0 0
    %238 = vmatprep.subr.bf16.mxu0 0
    %239 = vmatpush2.bf16.msra.mxu0 0
    %240 = vmatprep.subr.bf16.mxu0 0
    %241 = vmatpush2.bf16.msra.mxu0 0
    %242 = vmatprep.subr.bf16.mxu0 0
    %243 = vmatpush2.bf16.msra.mxu0 0
    %244 = vmatprep.subr.bf16.mxu0 0
    %245 = vmatpush2.bf16.msra.mxu0 0
    %246 = vmatprep.subr.bf16.mxu0 0
    %247 = vmatpush2.bf16.msra.mxu0 0
    %248 = vmatprep.mubr.bf16.mxu0 0
    %249 = vmatmul.mubr.bf16.gmra.mxu0 %v144
    %v250 = vpop.f32.mrf.mxu0
    %v251 = vadd.f32 %v166, %v250
    %v252 = vpop.f32.mrf.mxu0
    %v253 = vpop.f32.mrf.mxu0
    %v254 = vpop.f32.mrf.mxu0
    %255 = vdwg.mxu0
    %v256 = vmax.f32 %v251, 0.0
    %v257 = vpack.c.bf16 %v256, %v256
    %258 = vst [vmem:[#allocation2] sm:$0xf] %v257
  $region33: #{mlp_prefix_mapper.1} parent=0 // pred_fallthru
    _
  %v259 = vld [vmem:[#allocation2] sm:$0xf]
  %v260 = vld [vmem:[%s5] sm:$0xff]
  %v261 = vld [vmem:[%s5 + $0x8] sm:$0xff]
  %v262 = vld [vmem:[%s5 + $0x10] sm:$0xff]
  %v263 = vld [vmem:[%s5 + $0x18] sm:$0xff]
  %v264 = vld [vmem:[%s5 + $0x20] sm:$0xff]
  %v265 = vld [vmem:[%s5 + $0x28] sm:$0xff]
  %v266 = vld [vmem:[%s5 + $0x30] sm:$0xff]
  %v267 = vld [vmem:[%s5 + $0x38] sm:$0xff]
  %v268 = vld [vmem:[%s5 + $0x40] sm:$0xff]
  %v269 = vld [vmem:[%s5 + $0x48] sm:$0xff]
  %v270 = vld [vmem:[%s5 + $0x50] sm:$0xff]
  %v271 = vld [vmem:[%s5 + $0x58] sm:$0xff]
  %v272 = vld [vmem:[%s5 + $0x60] sm:$0xff]
  %v273 = vld [vmem:[%s5 + $0x68] sm:$0xff]
  %v274 = vld [vmem:[%s5 + $0x70] sm:$0xff]
  %v275 = vld [vmem:[%s5 + $0x78] sm:$0xff]
  %v276 = vld [vmem:[%s6] sm:$0x3]
  %v278 = vlaneseq
  %v279 = vshrl.u32 %v278, 7
  %v280 = vsub.s32 0, %v279
  %v281 = vrot.slane %v276, %v280
  %v282 = vlaneseq
  %v283 = vshrl.u32 %v282, 7
  %v284 = vsub.s32 1, %v283
  %v285 = vrot.slane %v276, %v284
  %v304 = vunpack.c.l.b16 %v260
  %v305 = vunpack.c.h.b16 %v260
  %v306 = vunpack.c.l.b16 %v261
  %v307 = vunpack.c.h.b16 %v261
  %v308 = vunpack.c.l.b16 %v262
  %v309 = vunpack.c.h.b16 %v262
  %v310 = vunpack.c.l.b16 %v263
  %v311 = vunpack.c.h.b16 %v263
  %v312 = vunpack.c.l.b16 %v264
  %v313 = vunpack.c.h.b16 %v264
  %v314 = vunpack.c.l.b16 %v265
  %v315 = vunpack.c.h.b16 %v265
  %v316 = vunpack.c.l.b16 %v266
  %v317 = vunpack.c.h.b16 %v266
  %v318 = vunpack.c.l.b16 %v267
  %v319 = vunpack.c.h.b16 %v267
  %v320 = vunpack.c.l.b16 %v268
  %v321 = vunpack.c.h.b16 %v268
  %v322 = vunpack.c.l.b16 %v269
  %v323 = vunpack.c.h.b16 %v269
  %v324 = vunpack.c.l.b16 %v270
  %v325 = vunpack.c.h.b16 %v270
  %v326 = vunpack.c.l.b16 %v271
  %v327 = vunpack.c.h.b16 %v271
  %v328 = vunpack.c.l.b16 %v272
  %v329 = vunpack.c.h.b16 %v272
  %v330 = vunpack.c.l.b16 %v273
  %v331 = vunpack.c.h.b16 %v273
  %v332 = vunpack.c.l.b16 %v274
  %v333 = vunpack.c.h.b16 %v274
  %v334 = vunpack.c.l.b16 %v275
  %v335 = vunpack.c.h.b16 %v275
  %v336 = vpack.c.b16 %v306, %v304
  %v337 = vpack.c.b16 %v307, %v305
  %v338 = vpack.c.b16 %v310, %v308
  %v339 = vpack.c.b16 %v311, %v309
  %v340 = vpack.c.b16 %v314, %v312
  %v341 = vpack.c.b16 %v315, %v313
  %v342 = vpack.c.b16 %v318, %v316
  %v343 = vpack.c.b16 %v319, %v317
  %v344 = vpack.c.b16 %v322, %v320
  %v345 = vpack.c.b16 %v323, %v321
  %v346 = vpack.c.b16 %v326, %v324
  %v347 = vpack.c.b16 %v327, %v325
  %v348 = vpack.c.b16 %v330, %v328
  %v349 = vpack.c.b16 %v331, %v329
  %v350 = vpack.c.b16 %v334, %v332
  %v351 = vpack.c.b16 %v335, %v333
  %368 = vmatprep.subr.bf16.mxu0 %v351
  %369 = vmatpush1.bf16.msra.mxu0 %v350
  %370 = vmatprep.subr.bf16.mxu0 %v349
  %371 = vmatpush1.bf16.msra.mxu0 %v348
  %372 = vmatprep.subr.bf16.mxu0 %v347
  %373 = vmatpush1.bf16.msra.mxu0 %v346
  %374 = vmatprep.subr.bf16.mxu0 %v345
  %375 = vmatpush1.bf16.msra.mxu0 %v344
  %376 = vmatprep.subr.bf16.mxu0 %v343
  %377 = vmatpush1.bf16.msra.mxu0 %v342
  %378 = vmatprep.subr.bf16.mxu0 %v341
  %379 = vmatpush1.bf16.msra.mxu0 %v340
  %380 = vmatprep.subr.bf16.mxu0 %v339
  %381 = vmatpush1.bf16.msra.mxu0 %v338
  %382 = vmatprep.subr.bf16.mxu0 %v337
  %383 = vmatpush1.bf16.msra.mxu0 %v336
  %384 = vmatprep.subr.bf16.mxu0 0
  %385 = vmatpush2.bf16.msra.mxu0 0
  %386 = vmatprep.subr.bf16.mxu0 0
  %387 = vmatpush2.bf16.msra.mxu0 0
  %388 = vmatprep.subr.bf16.mxu0 0
  %389 = vmatpush2.bf16.msra.mxu0 0
  %390 = vmatprep.subr.bf16.mxu0 0
  %391 = vmatpush2.bf16.msra.mxu0 0
  %392 = vmatprep.subr.bf16.mxu0 0
  %393 = vmatpush2.bf16.msra.mxu0 0
  %394 = vmatprep.subr.bf16.mxu0 0
  %395 = vmatpush2.bf16.msra.mxu0 0
  %396 = vmatprep.subr.bf16.mxu0 0
  %397 = vmatpush2.bf16.msra.mxu0 0
  %398 = vmatprep.subr.bf16.mxu0 0
  %399 = vmatpush2.bf16.msra.mxu0 0
  %400 = vmatprep.mubr.bf16.mxu0 0
  %401 = vmatmul.mubr.bf16.gmra.mxu0 %v259
  %v402 = vpop.f32.mrf.mxu0
  %v403 = vadd.f32 %v281, %v402
  %v404 = vpop.f32.mrf.mxu0
  %v405 = vadd.f32 %v285, %v404
  %v406 = vpop.f32.mrf.mxu0
  %v407 = vpop.f32.mrf.mxu0
  %408 = vdwg.mxu0
  %409 = vst [vmem:[%s7] sm:$0xff] %v403
  %410 = vst [vmem:[%s7 + $0x8] sm:$0xff] %v405
  // Predicated region
  $region34: #{mlp_prefix_mapper.1} parent=0 // pred_check
    _
  $region35: #{mlp_prefix_mapper.1} parent=0 // pred_check_branch
    %412 = sbr.rel (0) target = $region37
  $region36: #{mlp_prefix_mapper.1} parent=0 // pred_region
    _
  $region37: #{mlp_prefix_mapper.1} parent=0 // pred_fallthru
    _
  // Predicated region
  $region38: #{mlp_prefix_mapper.1} parent=0 // pred_check
    _
  $region39: #{mlp_prefix_mapper.1} parent=0 // pred_check_branch
    %414 = sbr.rel (0) target = $region41
  $region40: #{mlp_prefix_mapper.1} parent=0 // pred_region
    _
  $region41: #{mlp_prefix_mapper.1} parent=0 // pred_fallthru
    _

</llo_original>
